<compile_context>
chip_gen: v5e
topology: v5e:2x2
jax: 0.10.0
libtpu: 0.0.40
codegen_flags: <defaults>
</compile_context>

<pallas_src>
import functools

import jax
import jax.numpy as jnp
from jax.experimental import pallas as pl
from jax.experimental.pallas import tpu as pltpu

EPS = 0.0          # GIN epsilon (train_eps=False default)
LANE = 128         # lane width: pad feature dims / edge tiles to multiples of this
SUBLANE = 8        # sublane width: pad the node axis to a multiple of this

# Contract dim 0 of LHS against dim 0 of RHS (transposed-LHS matmul, MXU-native).
TN_DIM_NUMBERS = (((0,), (0,)), ((), ()))


def _round_up(v, m):
    return ((v + m - 1) // m) * m


def _gin_kernel(src_ref, dst_ref, ea_ref, x_ref, we_ref, w1_ref, b12_ref, w2_ref,
                out_ref, acc_ref, *, n_nodes_p, hidden_p):
    k = pl.program_id(0)

    @pl.when(k == 0)
    def _():
        acc_ref[...] = jnp.zeros_like(acc_ref)

    x = x_ref[...]            # [Np, Fp] f32
    src = src_ref[...]        # [1, te] int32 (padded edges carry sentinel >= Np)
    dst = dst_ref[...]        # [1, te] int32 (padded edges carry sentinel >= Np)
    te = src.shape[1]

    # Single node-id iota shared by both one-hots (halves the iota/compare/cast
    # VPU work vs. building two orientations).  Padded edges never match.
    node_iota = jax.lax.broadcasted_iota(jnp.int32, (n_nodes_p, te), 0)
    src_oh = (node_iota == src).astype(jnp.float32)   # [Np, te]
    dst_oh = (node_iota == dst).astype(jnp.float32)   # [Np, te]

    # Edge projection; b_edge is folded into we_ref via the ones column of ea_ref.
    e_proj = jnp.dot(ea_ref[...], we_ref[...],
                     preferred_element_type=jnp.float32)              # [te, Fp]
    # Gather x[src]: contract the node axis of both operands (transposed-LHS
    # matmul) so the one-hot is only ever built in the [Np, te] orientation.
    xj = jax.lax.dot_general(src_oh, x, TN_DIM_NUMBERS,
                             preferred_element_type=jnp.float32)      # [te, Fp]
    m = jnp.maximum(xj + e_proj, 0.0)                                 # GINE message

    # Scatter-add into the per-node accumulator: [Np, te] @ [te, Fp] -> [Np, Fp]
    acc_ref[...] += jnp.dot(dst_oh, m, preferred_element_type=jnp.float32)

    @pl.when(k == pl.num_programs(0) - 1)
    def _():
        h = (1.0 + EPS) * x + acc_ref[...]                            # GIN update
        b1 = b12_ref[:, :hidden_p]
        b2 = b12_ref[:, hidden_p:]
        h1 = jnp.maximum(
            jnp.dot(h, w1_ref[...], preferred_element_type=jnp.float32) + b1, 0.0)
        out_ref[...] = (jnp.dot(h1, w2_ref[...],
                                preferred_element_type=jnp.float32) + b2)


def pad_params(params):
    """One-time parameter prep: bias folds + lane padding of feature dims."""
    edge_dim, feat = params["w_edge"].shape
    hidden = params["w1"].shape[1]
    embed = params["w2"].shape[1]
    fp = _round_up(feat, LANE)
    hp = _round_up(hidden, LANE)
    dp = _round_up(embed, LANE)

    # Fold b_edge into w_edge as an extra row (edge_attr gets a ones column).
    we_aug = jnp.concatenate([params["w_edge"], params["b_edge"]], axis=0)
    we_aug = jnp.pad(we_aug, ((0, 0), (0, fp - feat)))                # [ed+1, Fp]
    w1 = jnp.pad(params["w1"], ((0, fp - feat), (0, hp - hidden)))    # [Fp, Hp]
    b1 = jnp.pad(params["b1"], ((0, 0), (0, hp - hidden)))            # [1, Hp]
    w2 = jnp.pad(params["w2"], ((0, hp - hidden), (0, dp - embed)))   # [Hp, Dp]
    b2 = jnp.pad(params["b2"], ((0, 0), (0, dp - embed)))             # [1, Dp]
    return {
        "w_edge_aug": we_aug,
        "w1": w1,
        "b12": jnp.concatenate([b1, b2], axis=1),                     # [1, Hp+Dp]
        "w2": w2,
        "feat_p": fp, "hidden_p": hp, "embed_p": dp, "embed_dim": embed,
    }


def mfgnn_gin_forward(x, edge_index, edge_attr, pparams, *, max_tile_e=512):
    """x: [N, F] f32, edge_index: [2, E] int, edge_attr: [E, edge_dim] f32.
    pparams: output of pad_params()."""
    n_nodes, feat = x.shape
    n_edges = edge_index.shape[1]
    edge_dim = edge_attr.shape[1]
    fp = pparams["feat_p"]
    hp = pparams["hidden_p"]
    dp = pparams["embed_p"]
    embed_dim = pparams["embed_dim"]
    np_ = _round_up(n_nodes, SUBLANE)

    # Edge tile: lane multiple (one-hot / MXU friendly), capped.  On v6e sweep
    # 256 -> 512 -> 1024 for large E to amortize the ~0.35 us/step grid overhead.
    te = min(_round_up(n_edges, LANE), _round_up(max_tile_e, LANE))
    e_pad = _round_up(n_edges, te)
    grid = (e_pad // te,)

    # Wrapper-side padding (all tiny, O(E) / O(N)):
    #  * x -> [Np, Fp] zero-padded (lane-dense xj/m/acc and unmasked stores)
    #  * edge_attr -> ones column appended (bias fold), zero-padded to e_pad rows
    #  * src/dst -> [1, e_pad] rows; padded edges get sentinel Np, so their
    #    one-hot columns are identically zero -> no in-kernel tail mask, no NaN.
    x_p = jnp.pad(x.astype(jnp.float32), ((0, np_ - n_nodes), (0, fp - feat)))
    ea_aug = jnp.concatenate(
        [edge_attr.astype(jnp.float32), jnp.ones((n_edges, 1), jnp.float32)], axis=1)
    ea_aug = jnp.pad(ea_aug, ((0, e_pad - n_edges), (0, 0)))          # [e_pad, ed+1]
    sentinel = jnp.int32(np_)
    src_row = jnp.full((1, e_pad), sentinel, jnp.int32)
    src_row = src_row.at[0, :n_edges].set(edge_index[0].astype(jnp.int32))
    dst_row = jnp.full((1, e_pad), sentinel, jnp.int32)
    dst_row = dst_row.at[0, :n_edges].set(edge_index[1].astype(jnp.int32))

    kernel = functools.partial(_gin_kernel, n_nodes_p=np_, hidden_p=hp)

    flops = (2 * e_pad * (edge_dim + 1) * fp      # edge projection
             + 4 * e_pad * np_ * fp               # gather + scatter matmuls
             + 2 * np_ * fp * hp                  # MLP layer 1
             + 2 * np_ * hp * dp)                 # MLP layer 2
    bytes_accessed = 4 * int(
        x_p.size + ea_aug.size + src_row.size + dst_row.size
        + pparams["w_edge_aug"].size + pparams["w1"].size
        + pparams["b12"].size + pparams["w2"].size + np_ * dp)
    cost = pl.CostEstimate(flops=flops, transcendentals=0,
                           bytes_accessed=bytes_accessed)

    # Explicit VMEM budget: double-buffered edge tiles + resident x/weights/acc/out
    # + one-hot and message intermediates; capped below v7x's 64 MiB physical.
    live_bytes = 4 * (2 * (te * (edge_dim + 1) + 2 * te)     # streamed edge tiles (x2 buf)
                      + 2 * np_ * fp                         # x + acc scratch
                      + (edge_dim + 1) * fp + fp * hp + (hp + dp) + hp * dp
                      + 2 * np_ * dp                         # output (double-buffered)
                      + 2 * np_ * te + 3 * te * fp)          # one-hots + e_proj/xj/m
    vmem_limit = int(min(max(4 * live_bytes, 16 << 20), 48 << 20))

    out_padded = pl.pallas_call(
        kernel,
        out_shape=jax.ShapeDtypeStruct((np_, dp), jnp.float32),
        grid=grid,
        in_specs=[
            pl.BlockSpec((1, te), lambda k: (0, k)),                 # src ids (lane-dense)
            pl.BlockSpec((1, te), lambda k: (0, k)),                 # dst ids (lane-dense)
            pl.BlockSpec((te, edge_dim + 1), lambda k: (k, 0)),      # edge_attr tile (+ones)
            pl.BlockSpec((np_, fp), lambda k: (0, 0)),               # x (resident)
            pl.BlockSpec((edge_dim + 1, fp), lambda k: (0, 0)),      # w_edge (+bias row)
            pl.BlockSpec((fp, hp), lambda k: (0, 0)),                # w1
            pl.BlockSpec((1, hp + dp), lambda k: (0, 0)),            # [b1 | b2]
            pl.BlockSpec((hp, dp), lambda k: (0, 0)),                # w2
        ],
        out_specs=pl.BlockSpec((np_, dp), lambda k: (0, 0)),
        scratch_shapes=[pltpu.VMEM((np_, fp), jnp.float32)],
        compiler_params=pltpu.CompilerParams(
            dimension_semantics=("arbitrary",),       # edge axis is a reduction
            vmem_limit_bytes=vmem_limit),
        cost_estimate=cost,
    )(src_row, dst_row, ea_aug, x_p,
      pparams["w_edge_aug"], pparams["w1"], pparams["b12"], pparams["w2"])

    return out_padded[:n_nodes, :embed_dim]


def _reference_forward(x, edge_index, edge_attr, params):
    """Pure-JAX reference for correctness checking (unpadded params)."""
    e = edge_attr @ params["w_edge"] + params["b_edge"]
    xj = x[edge_index[0]]
    m = jnp.maximum(xj + e, 0.0)
    agg = jnp.zeros_like(x).at[edge_index[1]].add(m)
    h = (1.0 + EPS) * x + agg
    h1 = jnp.maximum(h @ params["w1"] + params["b1"], 0.0)
    return h1 @ params["w2"] + params["b2"]


def init_params(key, feat_dim, edge_dim, hidden_dim, embed_dim):
    ks = jax.random.split(key, 6)
    scale = 0.1
    return {
        "w_edge": scale * jax.random.normal(ks[0], (edge_dim, feat_dim), jnp.float32),
        "b_edge": scale * jax.random.normal(ks[1], (1, feat_dim), jnp.float32),
        "w1": scale * jax.random.normal(ks[2], (feat_dim, hidden_dim), jnp.float32),
        "b1": scale * jax.random.normal(ks[3], (1, hidden_dim), jnp.float32),
        "w2": scale * jax.random.normal(ks[4], (hidden_dim, embed_dim), jnp.float32),
        "b2": scale * jax.random.normal(ks[5], (1, embed_dim), jnp.float32),
    }


if __name__ == "__main__":
    # Small shapes consistent with the module: init_dim (node feats) = 16,
    # hidden_dim = 64, embed_dim = 32, edge_dim = 10, num_layers = 1.
    N, F, E = 8, 16, 16
    EDGE_DIM, HIDDEN, EMBED = 10, 64, 32

    key = jax.random.PRNGKey(0)
    k_x, k_ei, k_ea, k_p = jax.random.split(key, 4)

    x = jax.random.normal(k_x, (N, F), jnp.float32)
    edge_index = jax.random.randint(k_ei, (2, E), 0, N, dtype=jnp.int32)
    edge_attr = jax.random.normal(k_ea, (E, EDGE_DIM), jnp.float32)
    params = init_params(k_p, F, EDGE_DIM, HIDDEN, EMBED)

    # One-time parameter prep (bias fold + lane-dense padding).
    pparams = pad_params(params)

    out = mfgnn_gin_forward(x, edge_index, edge_attr, pparams)
    out = jax.block_until_ready(out)

    ref = _reference_forward(x, edge_index, edge_attr, params)
    assert out.shape == (N, EMBED)
    assert jnp.allclose(out, ref, atol=1e-4, rtol=1e-4), float(
        jnp.max(jnp.abs(out - ref)))

    print("KERNEL_OK")
</pallas_src>

<mosaic_0001>
module attributes {stable_mosaic.version = 11 : i64} {
  func.func @_gin_kernel(%arg0: i32, %arg1: memref<1x128xi32, #tpu.memory_space<vmem>>, %arg2: memref<1x128xi32, #tpu.memory_space<vmem>>, %arg3: memref<128x11xf32, #tpu.memory_space<vmem>>, %arg4: memref<8x128xf32, #tpu.memory_space<vmem>>, %arg5: memref<11x128xf32, #tpu.memory_space<vmem>>, %arg6: memref<128x128xf32, #tpu.memory_space<vmem>>, %arg7: memref<1x256xf32, #tpu.memory_space<vmem>>, %arg8: memref<128x128xf32, #tpu.memory_space<vmem>>, %arg9: memref<8x128xf32, #tpu.memory_space<vmem>>, %arg10: memref<8x128xf32, #tpu.memory_space<vmem>>) attributes {dimension_semantics = [#tpu.dimension_semantics<arbitrary>], iteration_bounds = array<i64: 1>, scalar_prefetch = 0 : i64, scratch_operands = 1 : i64, tpu.core_type = #tpu.core_type<tc>, window_params = [{transform_indices = @transform_0, window_bounds = array<i64: 1, 128>}, {transform_indices = @transform_1, window_bounds = array<i64: 1, 128>}, {transform_indices = @transform_2, window_bounds = array<i64: 128, 11>}, {pipeline_mode = #tpu.pipeline_mode<synchronous>, transform_indices = @transform_3, window_bounds = array<i64: 8, 128>}, {pipeline_mode = #tpu.pipeline_mode<synchronous>, transform_indices = @transform_4, window_bounds = array<i64: 11, 128>}, {pipeline_mode = #tpu.pipeline_mode<synchronous>, transform_indices = @transform_5, window_bounds = array<i64: 128, 128>}, {pipeline_mode = #tpu.pipeline_mode<synchronous>, transform_indices = @transform_6, window_bounds = array<i64: 1, 256>}, {pipeline_mode = #tpu.pipeline_mode<synchronous>, transform_indices = @transform_7, window_bounds = array<i64: 128, 128>}, {pipeline_mode = #tpu.pipeline_mode<synchronous>, transform_indices = @transform_8, window_bounds = array<i64: 8, 128>}]} {
    %c0_i32 = arith.constant 0 : i32
    %0 = arith.cmpi eq, %arg0, %c0_i32 : i32
    %1 = arith.extui %0 : i1 to i32
    %c0_i32_0 = arith.constant 0 : i32
    %2 = arith.cmpi ne, %1, %c0_i32_0 : i32
    scf.if %2 {
      %cst_19 = arith.constant 0.000000e+00 : f32
      %29 = vector.broadcast %cst_19 : f32 to vector<8x128xf32>
      %c0_20 = arith.constant 0 : index
      %c0_21 = arith.constant 0 : index
      %30 = vector.load %arg10[%c0_20, %c0_21] : memref<8x128xf32, #tpu.memory_space<vmem>>, vector<8x128xf32>
      tpu.vector_store %arg10[%c0_20, %c0_21], %29 {strides = array<i32>} : memref<8x128xf32, #tpu.memory_space<vmem>>, vector<8x128xf32>,
    } else {
    }
    %c0 = arith.constant 0 : index
    %c0_1 = arith.constant 0 : index
    %3 = vector.load %arg4[%c0, %c0_1] : memref<8x128xf32, #tpu.memory_space<vmem>>, vector<8x128xf32>
    %c0_2 = arith.constant 0 : index
    %c0_3 = arith.constant 0 : index
    %4 = vector.load %arg1[%c0_2, %c0_3] : memref<1x128xi32, #tpu.memory_space<vmem>>, vector<1x128xi32>
    %c0_4 = arith.constant 0 : index
    %c0_5 = arith.constant 0 : index
    %5 = vector.load %arg2[%c0_4, %c0_5] : memref<1x128xi32, #tpu.memory_space<vmem>>, vector<1x128xi32>
    %6 = tpu.iota {dimensions = array<i32: 0>} : vector<8x128xi32>
    %7 = vector.broadcast %4 : vector<1x128xi32> to vector<8x128xi32>
    %8 = arith.cmpi eq, %6, %7 : vector<8x128xi32>
    %9 = arith.extui %8 : vector<8x128xi1> to vector<8x128xi32>
    %10 = arith.sitofp %9 : vector<8x128xi32> to vector<8x128xf32>
    %11 = vector.broadcast %5 : vector<1x128xi32> to vector<8x128xi32>
    %12 = arith.cmpi eq, %6, %11 : vector<8x128xi32>
    %13 = arith.extui %12 : vector<8x128xi1> to vector<8x128xi32>
    %14 = arith.sitofp %13 : vector<8x128xi32> to vector<8x128xf32>
    %c0_6 = arith.constant 0 : index
    %c0_7 = arith.constant 0 : index
    %15 = vector.load %arg3[%c0_6, %c0_7] : memref<128x11xf32, #tpu.memory_space<vmem>>, vector<128x11xf32>
    %c0_8 = arith.constant 0 : index
    %c0_9 = arith.constant 0 : index
    %16 = vector.load %arg5[%c0_8, %c0_9] : memref<11x128xf32, #tpu.memory_space<vmem>>, vector<11x128xf32>
    %cst = arith.constant dense<0.000000e+00> : vector<128x128xf32>
    %17 = tpu.matmul %15, %16, %cst {dimension_numbers = #tpu.dot_dimension_numbers<[1], [0], [0], [1], [0, 0, 1, 1], [], []>} : vector<128x11xf32>, vector<11x128xf32>, vector<128x128xf32> -> vector<128x128xf32>
    %cst_10 = arith.constant dense<0.000000e+00> : vector<128x128xf32>
    %18 = tpu.matmul %10, %3, %cst_10 {dimension_numbers = #tpu.dot_dimension_numbers<[0], [0], [1], [1], [0, 1, 1, 1], [], []>} : vector<8x128xf32>, vector<8x128xf32>, vector<128x128xf32> -> vector<128x128xf32>
    %19 = arith.addf %18, %17 : vector<128x128xf32>
    %cst_11 = arith.constant 0.000000e+00 : f32
    %20 = vector.broadcast %cst_11 : f32 to vector<128x128xf32>
    %21 = arith.maximumf %19, %20 : vector<128x128xf32>
    %c0_12 = arith.constant 0 : index
    %c0_13 = arith.constant 0 : index
    %22 = vector.load %arg10[%c0_12, %c0_13] : memref<8x128xf32, #tpu.memory_space<vmem>>, vector<8x128xf32>
    %cst_14 = arith.constant dense<0.000000e+00> : vector<8x128xf32>
    %23 = tpu.matmul %14, %21, %cst_14 {dimension_numbers = #tpu.dot_dimension_numbers<[1], [0], [0], [1], [0, 0, 1, 1], [], []>} : vector<8x128xf32>, vector<128x128xf32>, vector<8x128xf32> -> vector<8x128xf32>
    %24 = arith.addf %22, %23 : vector<8x128xf32>
    %c0_15 = arith.constant 0 : index
    %c0_16 = arith.constant 0 : index
    %25 = vector.load %arg10[%c0_15, %c0_16] : memref<8x128xf32, #tpu.memory_space<vmem>>, vector<8x128xf32>
    tpu.vector_store %arg10[%c0_15, %c0_16], %24 {strides = array<i32>} : memref<8x128xf32, #tpu.memory_space<vmem>>, vector<8x128xf32>,
    %c0_i32_17 = arith.constant 0 : i32
    %26 = arith.cmpi eq, %arg0, %c0_i32_17 : i32
    %27 = arith.extui %26 : i1 to i32
    %c0_i32_18 = arith.constant 0 : i32
    %28 = arith.cmpi ne, %27, %c0_i32_18 : i32
    scf.if %28 {
      %cst_19 = arith.constant 1.000000e+00 : f32
      %29 = vector.broadcast %cst_19 : f32 to vector<8x128xf32>
      %30 = arith.mulf %29, %3 : vector<8x128xf32>
      %c0_20 = arith.constant 0 : index
      %c0_21 = arith.constant 0 : index
      %31 = vector.load %arg10[%c0_20, %c0_21] : memref<8x128xf32, #tpu.memory_space<vmem>>, vector<8x128xf32>
      %32 = arith.addf %30, %31 : vector<8x128xf32>
      %c0_22 = arith.constant 0 : index
      %c0_23 = arith.constant 0 : index
      %33 = vector.load %arg7[%c0_22, %c0_23] : memref<1x256xf32, #tpu.memory_space<vmem>>, vector<1x128xf32>
      %c0_24 = arith.constant 0 : index
      %c128 = arith.constant 128 : index
      %34 = vector.load %arg7[%c0_24, %c128] : memref<1x256xf32, #tpu.memory_space<vmem>>, vector<1x128xf32>
      %c0_25 = arith.constant 0 : index
      %c0_26 = arith.constant 0 : index
      %35 = vector.load %arg6[%c0_25, %c0_26] : memref<128x128xf32, #tpu.memory_space<vmem>>, vector<128x128xf32>
      %cst_27 = arith.constant dense<0.000000e+00> : vector<8x128xf32>
      %36 = tpu.matmul %32, %35, %cst_27 {dimension_numbers = #tpu.dot_dimension_numbers<[1], [0], [0], [1], [0, 0, 1, 1], [], []>} : vector<8x128xf32>, vector<128x128xf32>, vector<8x128xf32> -> vector<8x128xf32>
      %37 = vector.broadcast %33 : vector<1x128xf32> to vector<8x128xf32>
      %38 = arith.addf %36, %37 : vector<8x128xf32>
      %cst_28 = arith.constant 0.000000e+00 : f32
      %39 = vector.broadcast %cst_28 : f32 to vector<8x128xf32>
      %40 = arith.maximumf %38, %39 : vector<8x128xf32>
      %c0_29 = arith.constant 0 : index
      %c0_30 = arith.constant 0 : index
      %41 = vector.load %arg8[%c0_29, %c0_30] : memref<128x128xf32, #tpu.memory_space<vmem>>, vector<128x128xf32>
      %cst_31 = arith.constant dense<0.000000e+00> : vector<8x128xf32>
      %42 = tpu.matmul %40, %41, %cst_31 {dimension_numbers = #tpu.dot_dimension_numbers<[1], [0], [0], [1], [0, 0, 1, 1], [], []>} : vector<8x128xf32>, vector<128x128xf32>, vector<8x128xf32> -> vector<8x128xf32>
      %43 = vector.broadcast %34 : vector<1x128xf32> to vector<8x128xf32>
      %44 = arith.addf %42, %43 : vector<8x128xf32>
      %c0_32 = arith.constant 0 : index
      %c0_33 = arith.constant 0 : index
      %45 = vector.load %arg9[%c0_32, %c0_33] : memref<8x128xf32, #tpu.memory_space<vmem>>, vector<8x128xf32>
      tpu.vector_store %arg9[%c0_32, %c0_33], %44 {strides = array<i32>} : memref<8x128xf32, #tpu.memory_space<vmem>>, vector<8x128xf32>,
    } else {
    }
    return
  }
  func.func @transform_0(%arg0: i32) -> (i32, i32) {
    %c0_i32 = arith.constant 0 : i32
    %c0_i32_0 = arith.constant 0 : i32
    return %c0_i32, %arg0 : i32, i32
  }
  func.func @transform_1(%arg0: i32) -> (i32, i32) {
    %c0_i32 = arith.constant 0 : i32
    %c0_i32_0 = arith.constant 0 : i32
    return %c0_i32, %arg0 : i32, i32
  }
  func.func @transform_2(%arg0: i32) -> (i32, i32) {
    %c0_i32 = arith.constant 0 : i32
    %c0_i32_0 = arith.constant 0 : i32
    return %arg0, %c0_i32 : i32, i32
  }
  func.func @transform_3(%arg0: i32) -> (i32, i32) {
    %c0_i32 = arith.constant 0 : i32
    %c0_i32_0 = arith.constant 0 : i32
    %c0_i32_1 = arith.constant 0 : i32
    return %c0_i32, %c0_i32_0 : i32, i32
  }
  func.func @transform_4(%arg0: i32) -> (i32, i32) {
    %c0_i32 = arith.constant 0 : i32
    %c0_i32_0 = arith.constant 0 : i32
    %c0_i32_1 = arith.constant 0 : i32
    return %c0_i32, %c0_i32_0 : i32, i32
  }
  func.func @transform_5(%arg0: i32) -> (i32, i32) {
    %c0_i32 = arith.constant 0 : i32
    %c0_i32_0 = arith.constant 0 : i32
    %c0_i32_1 = arith.constant 0 : i32
    return %c0_i32, %c0_i32_0 : i32, i32
  }
  func.func @transform_6(%arg0: i32) -> (i32, i32) {
    %c0_i32 = arith.constant 0 : i32
    %c0_i32_0 = arith.constant 0 : i32
    %c0_i32_1 = arith.constant 0 : i32
    return %c0_i32, %c0_i32_0 : i32, i32
  }
  func.func @transform_7(%arg0: i32) -> (i32, i32) {
    %c0_i32 = arith.constant 0 : i32
    %c0_i32_0 = arith.constant 0 : i32
    %c0_i32_1 = arith.constant 0 : i32
    return %c0_i32, %c0_i32_0 : i32, i32
  }
  func.func @transform_8(%arg0: i32) -> (i32, i32) {
    %c0_i32 = arith.constant 0 : i32
    %c0_i32_0 = arith.constant 0 : i32
    %c0_i32_1 = arith.constant 0 : i32
    return %c0_i32, %c0_i32_0 : i32, i32
  }
}

</mosaic_0001>

<llo_original>
// kernel: tpu_custom_call.1
$region0: #{tpu_custom_call.1}
  #allocation0 [shape = 'u32[]', space=smem, size = 0x4, offset = 0x4, fixed_abs, tag = 'smem constant byte address 0x4 - core index']
  #allocation1 [shape = 'u32[72,128]{1,0:T(1,128)}', space=vmem, size = 0x9000, scoped, tag = 'internal scratch']
  #allocation2 [shape = 'f32[8,128]{1,0:T(8,128)}', space=vmem, size = 0x1000, scoped, tag = 'scratch operand']
  %s0 = inlined_call_operand.vmem [shape: s32[1,128], index: 0, kind: input, shape index: {}]
  %s1 = inlined_call_operand.vmem [shape: s32[1,128], index: 1, kind: input, shape index: {}]
  %s2 = inlined_call_operand.vmem [shape: f32[128,11], index: 2, kind: input, shape index: {}]
  %s3 = inlined_call_operand.hbm [shape: f32[8,128], index: 3, kind: input, shape index: {}]
  %s4 = inlined_call_operand.vmem [shape: f32[11,128], index: 4, kind: input, shape index: {}]
  %s5 = inlined_call_operand.vmem [shape: f32[128,128], index: 5, kind: input, shape index: {}]
  %s6 = inlined_call_operand.vmem [shape: f32[1,256], index: 6, kind: input, shape index: {}]
  %s7 = inlined_call_operand.hbm [shape: f32[128,128], index: 7, kind: input, shape index: {}]
  %s8 = inlined_call_operand.hbm [shape: f32[8,128], index: 8, kind: output, shape index: {}]
  %s9 = sld [smem:[#allocation0]]
  $region58: #{tpu_custom_call.1} parent=0
    _
  %s11 = ssub.s32 1, %s9
  %s12 = scalar_select 0, %s11, %s9
  $region1: #{tpu_custom_call.1} parent=0
    #allocation3 [shape = 'u8[4096]{0}', space=vmem, size = 0x1000, scoped, tag = 'input window, operand 3, single buffered']
    #allocation4 [shape = 's32[1]{0}', space=sflag, size = 0x4, scoped, tag = 'scoped memory for tpu_custom_call.1']
    #allocation5 [shape = 's32[1]{0}', space=sflag, size = 0x4, scoped, tag = 'scoped memory for tpu_custom_call.1']
    #allocation6 [shape = 'u8[65536]{0}', space=vmem, size = 0x10000, scoped, tag = 'input window, operand 7, single buffered']
    #allocation7 [shape = 's32[1]{0}', space=sflag, size = 0x4, scoped, tag = 'scoped memory for tpu_custom_call.1']
    #allocation8 [shape = 'u8[4096]{0}', space=vmem, size = 0x1000, scoped, tag = 'output window, operand 0, single buffered']
    %13 = vsyncpa [#allocation4], 0
    %14 = vsyncpa [#allocation7], 0
    %15 = vsyncpa [#allocation5], 0
    // Predicated region
    $region2: #{tpu_custom_call.1} parent=1 // pred_check
      _
    $region3: #{tpu_custom_call.1} parent=1 // pred_check_branch
      %17 = sbr.rel (0) target = $region5
    $region4: #{tpu_custom_call.1} parent=1 // pred_region
      _
    $region5: #{tpu_custom_call.1} parent=1 // pred_fallthru
      _
    // Predicated region
    $region6: #{tpu_custom_call.1} parent=1 // pred_check
      _
    $region7: #{tpu_custom_call.1} parent=1 // pred_check_branch
      %19 = sbr.rel (0) target = $region9
    $region8: #{tpu_custom_call.1} parent=1 // pred_region
      _
    $region9: #{tpu_custom_call.1} parent=1 // pred_fallthru
      _
    // Predicated region
    $region10: #{tpu_custom_call.1} parent=1 // pred_check
      _
    $region11: #{tpu_custom_call.1} parent=1 // pred_check_branch
      %21 = sbr.rel (0) target = $region13
    $region12: #{tpu_custom_call.1} parent=1 // pred_region
      _
    $region13: #{tpu_custom_call.1} parent=1 // pred_fallthru
      _
    // Predicated region
    $region14: #{tpu_custom_call.1} parent=1 // pred_check
      _
    $region15: #{tpu_custom_call.1} parent=1 // pred_check_branch
      %23 = sbr.rel (0) target = $region17
    $region16: #{tpu_custom_call.1} parent=1 // pred_region
      %25 = vsyncadd [#allocation4], 0
      %s27 = sshll.u32 %s3, 4
      %s28 = int_to_ptr.hbm [resolvable:$true] %s27
      %s29 = sshll.u32 [#allocation3], 4
      %s30 = int_to_ptr.vmem [resolvable:$true] %s29
      %32 = dma.hbm_to_vmem [thread:$0]  %s28, 128, %s30, [#allocation4]
    $region17: #{tpu_custom_call.1} parent=1 // pred_fallthru
      _
    // Predicated region
    $region18: #{tpu_custom_call.1} parent=1 // pred_check
      _
    $region19: #{tpu_custom_call.1} parent=1 // pred_check_branch
      %34 = sbr.rel (0) target = $region21
    $region20: #{tpu_custom_call.1} parent=1 // pred_region
      _
    $region21: #{tpu_custom_call.1} parent=1 // pred_fallthru
      _
    // Predicated region
    $region22: #{tpu_custom_call.1} parent=1 // pred_check
      _
    $region23: #{tpu_custom_call.1} parent=1 // pred_check_branch
      %36 = sbr.rel (0) target = $region25
    $region24: #{tpu_custom_call.1} parent=1 // pred_region
      _
    $region25: #{tpu_custom_call.1} parent=1 // pred_fallthru
      _
    // Predicated region
    $region26: #{tpu_custom_call.1} parent=1 // pred_check
      _
    $region27: #{tpu_custom_call.1} parent=1 // pred_check_branch
      %38 = sbr.rel (0) target = $region29
    $region28: #{tpu_custom_call.1} parent=1 // pred_region
      _
    $region29: #{tpu_custom_call.1} parent=1 // pred_fallthru
      _
    // Predicated region
    $region30: #{tpu_custom_call.1} parent=1 // pred_check
      _
    $region31: #{tpu_custom_call.1} parent=1 // pred_check_branch
      %40 = sbr.rel (0) target = $region33
    $region32: #{tpu_custom_call.1} parent=1 // pred_region
      %42 = vsyncadd [#allocation7], 0
      %s43 = sshll.u32 %s7, 4
      %s44 = int_to_ptr.hbm [resolvable:$true] %s43
      %s45 = sshll.u32 [#allocation6], 4
      %s46 = int_to_ptr.vmem [resolvable:$true] %s45
      %51 = dma.hbm_to_vmem [thread:$0]  %s44, 2048, %s46, [#allocation7], 128, 128, 8
    $region33: #{tpu_custom_call.1} parent=1 // pred_fallthru
      _
    // Predicated region
    $region34: #{tpu_custom_call.1} parent=1 // pred_check
      _
    $region35: #{tpu_custom_call.1} parent=1 // pred_check_branch
      %53 = sbr.rel (0) target = $region37
    $region36: #{tpu_custom_call.1} parent=1 // pred_region
      %55 = dma.done [#allocation4], 128
    $region37: #{tpu_custom_call.1} parent=1 // pred_fallthru
      _
    // Predicated region
    $region38: #{tpu_custom_call.1} parent=1 // pred_check
      _
    $region39: #{tpu_custom_call.1} parent=1 // pred_check_branch
      %57 = sbr.rel (0) target = $region41
    $region40: #{tpu_custom_call.1} parent=1 // pred_region
      %59 = dma.done [#allocation7], 2048
    $region41: #{tpu_custom_call.1} parent=1 // pred_fallthru
      _
    %p60 = scmp.eq.s32.totalorder 0, 0
    // Predicated region
    $region42: #{tpu_custom_call.1} parent=1 // pred_check
      %p61 = pneg %p60
    $region43: #{tpu_custom_call.1} parent=1 // pred_check_branch
      %63 = sbr.rel (%p61) target = $region45
    $region44: #{tpu_custom_call.1} parent=1 // pred_region
      %64 = vst [vmem:[#allocation2] sm:$0xff] 0.0
    $region45: #{tpu_custom_call.1} parent=1 // pred_fallthru
      _
    %v65 = vld [vmem:[#allocation3] sm:$0xff]
    %v66 = vld [vmem:[%s0] sm:$0x1]
    %v67 = vld [vmem:[%s1] sm:$0x1]
    %v68 = vlaneseq
    %v69 = vshrl.u32 %v68, 7
    %v70 = vperm.slane %v66, 0
    %vm71 = vcmp.eq.s32.totalorder %v69, %v70
    %v72 = vsel %vm71, 1, 0
    %v73 = vcvt.s32.f32 %v72
    %v74 = vperm.slane %v67, 0
    %vm75 = vcmp.eq.s32.totalorder %v69, %v74
    %v76 = vsel %vm75, 1, 0
    %v77 = vcvt.s32.f32 %v76
    %v78 = vld [vmem:[%s2] sm:$0xff]
    %v79 = vld [vmem:[%s2 + $0x8] sm:$0xff]
    %v80 = vld [vmem:[%s2 + $0x10] sm:$0xff]
    %v81 = vld [vmem:[%s2 + $0x18] sm:$0xff]
    %v82 = vld [vmem:[%s2 + $0x20] sm:$0xff]
    %v83 = vld [vmem:[%s2 + $0x28] sm:$0xff]
    %v84 = vld [vmem:[%s2 + $0x30] sm:$0xff]
    %v85 = vld [vmem:[%s2 + $0x38] sm:$0xff]
    %v86 = vld [vmem:[%s2 + $0x40] sm:$0xff]
    %v87 = vld [vmem:[%s2 + $0x48] sm:$0xff]
    %v88 = vld [vmem:[%s2 + $0x50] sm:$0xff]
    %v89 = vld [vmem:[%s2 + $0x58] sm:$0xff]
    %v90 = vld [vmem:[%s2 + $0x60] sm:$0xff]
    %v91 = vld [vmem:[%s2 + $0x68] sm:$0xff]
    %v92 = vld [vmem:[%s2 + $0x70] sm:$0xff]
    %v93 = vld [vmem:[%s2 + $0x78] sm:$0xff]
    %v94 = vld [vmem:[%s4] sm:$0xff]
    %v95 = vld [vmem:[%s4 + $0x8] sm:$0x7]
    %vm96 = vcmask 89088
    %v98 = vsel %vm96, %v78, 0
    %v101 = vsel %vm96, %v79, 0
    %v104 = vsel %vm96, %v80, 0
    %v107 = vsel %vm96, %v81, 0
    %v110 = vsel %vm96, %v82, 0
    %v113 = vsel %vm96, %v83, 0
    %v116 = vsel %vm96, %v84, 0
    %v119 = vsel %vm96, %v85, 0
    %v122 = vsel %vm96, %v86, 0
    %v125 = vsel %vm96, %v87, 0
    %v128 = vsel %vm96, %v88, 0
    %v131 = vsel %vm96, %v89, 0
    %v134 = vsel %vm96, %v90, 0
    %v137 = vsel %vm96, %v91, 0
    %v140 = vsel %vm96, %v92, 0
    %v143 = vsel %vm96, %v93, 0
    %vm145 = vcmask 1042432
    %v147 = vsel %vm145, %v95, 0
    %149 = vmatpush.msra.mxu0 0.0
    %150 = vmatpush.msra.mxu0 0.0
    %151 = vmatpush.msra.mxu0 0.0
    %152 = vmatpush.msra.mxu0 0.0
    %153 = vmatpush.msra.mxu0 0.0
    %154 = vmatpush.msra.mxu0 0.0
    %155 = vmatpush.msra.mxu0 0.0
    %156 = vmatpush.msra.mxu0 0.0
    %157 = vmatpush.msra.mxu0 0.0
    %158 = vmatpush.msra.mxu0 0.0
    %159 = vmatpush.msra.mxu0 0.0
    %160 = vmatpush.msra.mxu0 0.0
    %161 = vmatpush.msra.mxu0 0.0
    %162 = vmatpush.msra.mxu0 0.0
    %163 = vmatpush.msra.mxu0 %v147
    %164 = vmatpush.msra.mxu0 %v94
    %165 = vmatmul.f32.gmra.mxu0 %v98
    %v166 = vpop.f32.mrf.mxu0
    %v167 = vadd.f32 0.0, %v166
    %168 = vmatmul.f32.gmra.mxu0 %v101
    %v169 = vpop.f32.mrf.mxu0
    %v170 = vadd.f32 0.0, %v169
    %171 = vmatmul.f32.gmra.mxu0 %v104
    %v172 = vpop.f32.mrf.mxu0
    %v173 = vadd.f32 0.0, %v172
    %174 = vmatmul.f32.gmra.mxu0 %v107
    %v175 = vpop.f32.mrf.mxu0
    %v176 = vadd.f32 0.0, %v175
    %177 = vmatmul.f32.gmra.mxu0 %v110
    %v178 = vpop.f32.mrf.mxu0
    %v179 = vadd.f32 0.0, %v178
    %180 = vmatmul.f32.gmra.mxu0 %v113
    %v181 = vpop.f32.mrf.mxu0
    %v182 = vadd.f32 0.0, %v181
    %183 = vmatmul.f32.gmra.mxu0 %v116
    %v184 = vpop.f32.mrf.mxu0
    %v185 = vadd.f32 0.0, %v184
    %186 = vmatmul.f32.gmra.mxu0 %v119
    %v187 = vpop.f32.mrf.mxu0
    %v188 = vadd.f32 0.0, %v187
    %189 = vmatmul.f32.gmra.mxu0 %v122
    %v190 = vpop.f32.mrf.mxu0
    %v191 = vadd.f32 0.0, %v190
    %192 = vmatmul.f32.gmra.mxu0 %v125
    %v193 = vpop.f32.mrf.mxu0
    %v194 = vadd.f32 0.0, %v193
    %195 = vmatmul.f32.gmra.mxu0 %v128
    %v196 = vpop.f32.mrf.mxu0
    %v197 = vadd.f32 0.0, %v196
    %198 = vmatmul.f32.gmra.mxu0 %v131
    %v199 = vpop.f32.mrf.mxu0
    %v200 = vadd.f32 0.0, %v199
    %201 = vmatmul.f32.gmra.mxu0 %v134
    %v202 = vpop.f32.mrf.mxu0
    %v203 = vadd.f32 0.0, %v202
    %204 = vmatmul.f32.gmra.mxu0 %v137
    %v205 = vpop.f32.mrf.mxu0
    %v206 = vadd.f32 0.0, %v205
    %207 = vmatmul.f32.gmra.mxu0 %v140
    %v208 = vpop.f32.mrf.mxu0
    %v209 = vadd.f32 0.0, %v208
    %210 = vmatmul.f32.gmra.mxu0 %v143
    %v211 = vpop.f32.mrf.mxu0
    %v212 = vadd.f32 0.0, %v211
    %213 = vdwg.mxu0
    %214 = vxpose.xlu0.b32.start [1/16] %v73, 128
    %215 = vxpose.xlu0.b32.cont [2/16] 0.0, 128
    %216 = vxpose.xlu0.b32.cont [3/16] 0.0, 128
    %217 = vxpose.xlu0.b32.cont [4/16] 0.0, 128
    %218 = vxpose.xlu0.b32.cont [5/16] 0.0, 128
    %219 = vxpose.xlu0.b32.cont [6/16] 0.0, 128
    %220 = vxpose.xlu0.b32.cont [7/16] 0.0, 128
    %221 = vxpose.xlu0.b32.cont [8/16] 0.0, 128
    %222 = vxpose.xlu0.b32.cont [9/16] 0.0, 128
    %223 = vxpose.xlu0.b32.cont [10/16] 0.0, 128
    %224 = vxpose.xlu0.b32.cont [11/16] 0.0, 128
    %225 = vxpose.xlu0.b32.cont [12/16] 0.0, 128
    %226 = vxpose.xlu0.b32.cont [13/16] 0.0, 128
    %227 = vxpose.xlu0.b32.cont [14/16] 0.0, 128
    %228 = vxpose.xlu0.b32.cont [15/16] 0.0, 128
    %229 = vxpose.xlu0.b32.end [16/16] 0.0, 128
    %v230 = vpop.trf.xlu0
    %v231 = vpop.trf.xlu0
    %v232 = vpop.trf.xlu0
    %v233 = vpop.trf.xlu0
    %v234 = vpop.trf.xlu0
    %v235 = vpop.trf.xlu0
    %v236 = vpop.trf.xlu0
    %v237 = vpop.trf.xlu0
    %v238 = vpop.trf.xlu0
    %v239 = vpop.trf.xlu0
    %v240 = vpop.trf.xlu0
    %v241 = vpop.trf.xlu0
    %v242 = vpop.trf.xlu0
    %v243 = vpop.trf.xlu0
    %v244 = vpop.trf.xlu0
    %v245 = vpop.trf.xlu0
    %vm246 = vcmask 64512
    %v248 = vsel %vm246, %v230, 0
    %v251 = vsel %vm246, %v231, 0
    %v254 = vsel %vm246, %v232, 0
    %v257 = vsel %vm246, %v233, 0
    %v260 = vsel %vm246, %v234, 0
    %v263 = vsel %vm246, %v235, 0
    %v266 = vsel %vm246, %v236, 0
    %v269 = vsel %vm246, %v237, 0
    %v272 = vsel %vm246, %v238, 0
    %v275 = vsel %vm246, %v239, 0
    %v278 = vsel %vm246, %v240, 0
    %v281 = vsel %vm246, %v241, 0
    %v284 = vsel %vm246, %v242, 0
    %v287 = vsel %vm246, %v243, 0
    %v290 = vsel %vm246, %v244, 0
    %v293 = vsel %vm246, %v245, 0
    %295 = vmatpush.msra.mxu0 0.0
    %296 = vmatpush.msra.mxu0 0.0
    %297 = vmatpush.msra.mxu0 0.0
    %298 = vmatpush.msra.mxu0 0.0
    %299 = vmatpush.msra.mxu0 0.0
    %300 = vmatpush.msra.mxu0 0.0
    %301 = vmatpush.msra.mxu0 0.0
    %302 = vmatpush.msra.mxu0 0.0
    %303 = vmatpush.msra.mxu0 0.0
    %304 = vmatpush.msra.mxu0 0.0
    %305 = vmatpush.msra.mxu0 0.0
    %306 = vmatpush.msra.mxu0 0.0
    %307 = vmatpush.msra.mxu0 0.0
    %308 = vmatpush.msra.mxu0 0.0
    %309 = vmatpush.msra.mxu0 0.0
    %310 = vmatpush.msra.mxu0 %v65
    %311 = vmatmul.f32.gmra.mxu0 %v248
    %v312 = vpop.f32.mrf.mxu0
    %v313 = vadd.f32 %v167, %v312
    %314 = vmatmul.f32.gmra.mxu0 %v251
    %v315 = vpop.f32.mrf.mxu0
    %v316 = vadd.f32 %v170, %v315
    %317 = vmatmul.f32.gmra.mxu0 %v254
    %v318 = vpop.f32.mrf.mxu0
    %v319 = vadd.f32 %v173, %v318
    %320 = vmatmul.f32.gmra.mxu0 %v257
    %v321 = vpop.f32.mrf.mxu0
    %v322 = vadd.f32 %v176, %v321
    %323 = vmatmul.f32.gmra.mxu0 %v260
    %v324 = vpop.f32.mrf.mxu0
    %v325 = vadd.f32 %v179, %v324
    %326 = vmatmul.f32.gmra.mxu0 %v263
    %v327 = vpop.f32.mrf.mxu0
    %v328 = vadd.f32 %v182, %v327
    %329 = vmatmul.f32.gmra.mxu0 %v266
    %v330 = vpop.f32.mrf.mxu0
    %v331 = vadd.f32 %v185, %v330
    %332 = vmatmul.f32.gmra.mxu0 %v269
    %v333 = vpop.f32.mrf.mxu0
    %v334 = vadd.f32 %v188, %v333
    %335 = vmatmul.f32.gmra.mxu0 %v272
    %v336 = vpop.f32.mrf.mxu0
    %v337 = vadd.f32 %v191, %v336
    %338 = vmatmul.f32.gmra.mxu0 %v275
    %v339 = vpop.f32.mrf.mxu0
    %v340 = vadd.f32 %v194, %v339
    %341 = vmatmul.f32.gmra.mxu0 %v278
    %v342 = vpop.f32.mrf.mxu0
    %v343 = vadd.f32 %v197, %v342
    %344 = vmatmul.f32.gmra.mxu0 %v281
    %v345 = vpop.f32.mrf.mxu0
    %v346 = vadd.f32 %v200, %v345
    %347 = vmatmul.f32.gmra.mxu0 %v284
    %v348 = vpop.f32.mrf.mxu0
    %v349 = vadd.f32 %v203, %v348
    %350 = vmatmul.f32.gmra.mxu0 %v287
    %v351 = vpop.f32.mrf.mxu0
    %v352 = vadd.f32 %v206, %v351
    %353 = vmatmul.f32.gmra.mxu0 %v290
    %v354 = vpop.f32.mrf.mxu0
    %v355 = vadd.f32 %v209, %v354
    %356 = vmatmul.f32.gmra.mxu0 %v293
    %v357 = vpop.f32.mrf.mxu0
    %v358 = vadd.f32 %v212, %v357
    %359 = vdwg.mxu0
    %v360 = vmax.f32 %v313, 0.0
    %v361 = vmax.f32 %v316, 0.0
    %v362 = vmax.f32 %v319, 0.0
    %v363 = vmax.f32 %v322, 0.0
    %v364 = vmax.f32 %v325, 0.0
    %v365 = vmax.f32 %v328, 0.0
    %v366 = vmax.f32 %v331, 0.0
    %v367 = vmax.f32 %v334, 0.0
    %v368 = vmax.f32 %v337, 0.0
    %v369 = vmax.f32 %v340, 0.0
    %v370 = vmax.f32 %v343, 0.0
    %v371 = vmax.f32 %v346, 0.0
    %v372 = vmax.f32 %v349, 0.0
    %v373 = vmax.f32 %v352, 0.0
    %v374 = vmax.f32 %v355, 0.0
    %v375 = vmax.f32 %v358, 0.0
    %v376 = vld [vmem:[#allocation2] sm:$0xff]
    %377 = vmatpush.msra.mxu0 %v375
    %378 = vmatpush.msra.mxu0 %v374
    %379 = vmatpush.msra.mxu0 %v373
    %380 = vmatpush.msra.mxu0 %v372
    %381 = vmatpush.msra.mxu0 %v371
    %382 = vmatpush.msra.mxu0 %v370
    %383 = vmatpush.msra.mxu0 %v369
    %384 = vmatpush.msra.mxu0 %v368
    %385 = vmatpush.msra.mxu0 %v367
    %386 = vmatpush.msra.mxu0 %v366
    %387 = vmatpush.msra.mxu0 %v365
    %388 = vmatpush.msra.mxu0 %v364
    %389 = vmatpush.msra.mxu0 %v363
    %390 = vmatpush.msra.mxu0 %v362
    %391 = vmatpush.msra.mxu0 %v361
    %392 = vmatpush.msra.mxu0 %v360
    %393 = vmatmul.f32.gmra.mxu0 %v77
    %v394 = vpop.f32.mrf.mxu0
    %v395 = vadd.f32 0.0, %v394
    %396 = vdwg.mxu0
    %v397 = vadd.f32 %v376, %v395
    %398 = vst [vmem:[#allocation2] sm:$0xff] %v397
    // Predicated region
    $region46: #{tpu_custom_call.1} parent=1 // pred_check
      %p399 = pneg %p60
    $region47: #{tpu_custom_call.1} parent=1 // pred_check_branch
      %401 = sbr.rel (%p399) target = $region49
    $region48: #{tpu_custom_call.1} parent=1 // pred_region
      %v402 = vld [vmem:[#allocation2] sm:$0xff]
      %v403 = vadd.f32 %v65, %v402
      %v404 = vld [vmem:[%s6] sm:$0x1]
      %v405 = vld [vmem:[%s6 + $0x1] sm:$0x1]
      %v406 = vld [vmem:[%s5] sm:$0xff]
      %v407 = vld [vmem:[%s5 + $0x8] sm:$0xff]
      %v408 = vld [vmem:[%s5 + $0x10] sm:$0xff]
      %v409 = vld [vmem:[%s5 + $0x18] sm:$0xff]
      %v410 = vld [vmem:[%s5 + $0x20] sm:$0xff]
      %v411 = vld [vmem:[%s5 + $0x28] sm:$0xff]
      %v412 = vld [vmem:[%s5 + $0x30] sm:$0xff]
      %v413 = vld [vmem:[%s5 + $0x38] sm:$0xff]
      %v414 = vld [vmem:[%s5 + $0x40] sm:$0xff]
      %v415 = vld [vmem:[%s5 + $0x48] sm:$0xff]
      %v416 = vld [vmem:[%s5 + $0x50] sm:$0xff]
      %v417 = vld [vmem:[%s5 + $0x58] sm:$0xff]
      %v418 = vld [vmem:[%s5 + $0x60] sm:$0xff]
      %v419 = vld [vmem:[%s5 + $0x68] sm:$0xff]
      %v420 = vld [vmem:[%s5 + $0x70] sm:$0xff]
      %v421 = vld [vmem:[%s5 + $0x78] sm:$0xff]
      %v423 = vperm.slane %v404, 0
      %425 = vmatpush.msra.mxu0 %v421
      %426 = vmatpush.msra.mxu0 %v420
      %427 = vmatpush.msra.mxu0 %v419
      %428 = vmatpush.msra.mxu0 %v418
      %429 = vmatpush.msra.mxu0 %v417
      %430 = vmatpush.msra.mxu0 %v416
      %431 = vmatpush.msra.mxu0 %v415
      %432 = vmatpush.msra.mxu0 %v414
      %433 = vmatpush.msra.mxu0 %v413
      %434 = vmatpush.msra.mxu0 %v412
      %435 = vmatpush.msra.mxu0 %v411
      %436 = vmatpush.msra.mxu0 %v410
      %437 = vmatpush.msra.mxu0 %v409
      %438 = vmatpush.msra.mxu0 %v408
      %439 = vmatpush.msra.mxu0 %v407
      %440 = vmatpush.msra.mxu0 %v406
      %441 = vmatmul.f32.gmra.mxu0 %v403
      %v442 = vpop.f32.mrf.mxu0
      %v443 = vadd.f32 %v423, %v442
      %444 = vdwg.mxu0
      %v445 = vmax.f32 %v443, 0.0
      %v446 = vld [vmem:[#allocation6] sm:$0xff]
      %v447 = vld [vmem:[#allocation6 + $0x8] sm:$0xff]
      %v448 = vld [vmem:[#allocation6 + $0x10] sm:$0xff]
      %v449 = vld [vmem:[#allocation6 + $0x18] sm:$0xff]
      %v450 = vld [vmem:[#allocation6 + $0x20] sm:$0xff]
      %v451 = vld [vmem:[#allocation6 + $0x28] sm:$0xff]
      %v452 = vld [vmem:[#allocation6 + $0x30] sm:$0xff]
      %v453 = vld [vmem:[#allocation6 + $0x38] sm:$0xff]
      %v454 = vld [vmem:[#allocation6 + $0x40] sm:$0xff]
      %v455 = vld [vmem:[#allocation6 + $0x48] sm:$0xff]
      %v456 = vld [vmem:[#allocation6 + $0x50] sm:$0xff]
      %v457 = vld [vmem:[#allocation6 + $0x58] sm:$0xff]
      %v458 = vld [vmem:[#allocation6 + $0x60] sm:$0xff]
      %v459 = vld [vmem:[#allocation6 + $0x68] sm:$0xff]
      %v460 = vld [vmem:[#allocation6 + $0x70] sm:$0xff]
      %v461 = vld [vmem:[#allocation6 + $0x78] sm:$0xff]
      %v463 = vperm.slane %v405, 0
      %465 = vmatpush.msra.mxu0 %v461
      %466 = vmatpush.msra.mxu0 %v460
      %467 = vmatpush.msra.mxu0 %v459
      %468 = vmatpush.msra.mxu0 %v458
      %469 = vmatpush.msra.mxu0 %v457
      %470 = vmatpush.msra.mxu0 %v456
      %471 = vmatpush.msra.mxu0 %v455
      %472 = vmatpush.msra.mxu0 %v454
      %473 = vmatpush.msra.mxu0 %v453
      %474 = vmatpush.msra.mxu0 %v452
      %475 = vmatpush.msra.mxu0 %v451
      %476 = vmatpush.msra.mxu0 %v450
      %477 = vmatpush.msra.mxu0 %v449
      %478 = vmatpush.msra.mxu0 %v448
      %479 = vmatpush.msra.mxu0 %v447
      %480 = vmatpush.msra.mxu0 %v446
      %481 = vmatmul.f32.gmra.mxu0 %v445
      %v482 = vpop.f32.mrf.mxu0
      %v483 = vadd.f32 %v463, %v482
      %484 = vdwg.mxu0
      %485 = vst [vmem:[#allocation8] sm:$0xff] %v483
    $region49: #{tpu_custom_call.1} parent=1 // pred_fallthru
      _
    // Predicated region
    $region50: #{tpu_custom_call.1} parent=1 // pred_check
      _
    $region51: #{tpu_custom_call.1} parent=1 // pred_check_branch
      %487 = sbr.rel (0) target = $region53
    $region52: #{tpu_custom_call.1} parent=1 // pred_region
      %489 = vsyncadd [#allocation5], 0
      %s491 = sshll.u32 [#allocation8], 4
      %s492 = int_to_ptr.vmem [resolvable:$true] %s491
      %s493 = sshll.u32 %s8, 4
      %s494 = int_to_ptr.hbm [resolvable:$true] %s493
      %496 = dma.vmem_to_hbm [thread:$0]  %s492, 128, %s494, [#allocation5]
    $region53: #{tpu_custom_call.1} parent=1 // pred_fallthru
      _
    // Predicated region
    $region54: #{tpu_custom_call.1} parent=1 // pred_check
      _
    $region55: #{tpu_custom_call.1} parent=1 // pred_check_branch
      %498 = sbr.rel (0) target = $region57
    $region56: #{tpu_custom_call.1} parent=1 // pred_region
      %500 = dma.done [#allocation5], 128
    $region57: #{tpu_custom_call.1} parent=1 // pred_fallthru
      _
    %501 = vsyncpa [#allocation4], 1
    %502 = vsyncpa [#allocation7], 1
    %503 = vsyncpa [#allocation5], 1

</llo_original>
